<compile_context>
chip_gen: v5e
topology: v5e:2x2
jax: 0.10.0
libtpu: 0.0.40
codegen_flags: <defaults>
</compile_context>

<pallas_src>
import jax
import jax.numpy as jnp
from jax.experimental import pallas as pl
from jax.experimental.pallas import tpu as pltpu


_SMALL_DIM = 16   # D_out at or below this takes the lane-dense [feature, batch] path.
_LANE = 128


def _round_up(n, m):
    return pl.cdiv(n, m) * m


def _sublane_pack(dtype):
    # 8 sublanes for 32-bit, 16 for 16-bit, 32 for 8-bit packed dtypes.
    return max(8, 32 // jnp.dtype(dtype).itemsize)


def _vmem_limit(est_bytes):
    # Scoped-VMEM defaults: 16 MiB (v5e) / 32 MiB (v6e, v7x). Only raise the
    # limit when the estimated footprint needs it; cap at 64 MiB so the request
    # stays within v7x's 64 MiB physical VMEM.
    if est_bytes <= 12 * 1024 * 1024:
        return None
    return int(min(2 * est_bytes, 64 * 1024 * 1024))


def _make_feature_major_kernel(D_in, H, D_out, unroll_l1):
    """Fused MLP in [feature, batch] layout (batch on the 128-lane axis)."""

    def kernel(xT_ref, w1T_ref, b1_ref, w2_ref, b2_ref, oT_ref):
        tile_b = xT_ref.shape[1]
        b1 = b1_ref[...].astype(jnp.float32)                  # [H, 1]

        # ---- layer 1: h^T = W1^T @ x^T + b1 -> [H, tile_b] ------------------
        if unroll_l1:
            xT = xT_ref[...].astype(jnp.float32)              # [D_in, tile_b]
            w1T = w1T_ref[...].astype(jnp.float32)            # [H, D_in]
            hT = jnp.broadcast_to(b1, (H, tile_b))            # hoisted bias bcast
            for k in range(D_in):                             # static unroll
                # [H,1] (tiny lane-broadcast) * [1,tile_b] (sublane-broadcast of
                # a lane-dense row): pure VPU FMAs, no tile_b-sized relayouts.
                hT = hT + w1T[:, k:k + 1] * xT[k:k + 1, :]
        else:
            hT = jnp.dot(w1T_ref[...], xT_ref[...],
                         preferred_element_type=jnp.float32) + b1

        h_relu = jnp.maximum(hT, 0.0)                         # [H, tile_b] f32

        # ---- layer 2: y^T = W2^T @ h_relu^T + b2 -> [D_out, tile_b] ---------
        # D_out is tiny here: per-output-column VPU multiply + sublane
        # reduction keeps the lane (batch) axis dense end-to-end.
        w2 = w2_ref[...].astype(jnp.float32)                  # [H, D_out]
        rows = []
        for n in range(D_out):                                # static unroll
            acc = jnp.sum(h_relu * w2[:, n:n + 1], axis=0, keepdims=True)
            rows.append(acc + b2_ref[n])                      # b2 scalar via SMEM
        yT = rows[0] if D_out == 1 else jnp.concatenate(rows, axis=0)

        oT_ref[...] = yT.astype(oT_ref.dtype)                 # lane-dense store

    return kernel


def _mxu_kernel(x_ref, w1_ref, b1_ref, w2_ref, b2_ref, o_ref):
    """Fused MLP in [batch, feature] layout on the MXU (large D_out)."""
    # Feed native (ideally bf16) operands; accumulate in f32 on the MXU.
    h = jnp.dot(x_ref[...], w1_ref[...], preferred_element_type=jnp.float32)
    h_relu = jnp.maximum(h + b1_ref[...].astype(jnp.float32), 0.0)
    # NOTE: if w2 is bf16 this downcasts the f32 activations to match the MXU feed.
    y = jnp.dot(h_relu.astype(w2_ref.dtype), w2_ref[...],
                preferred_element_type=jnp.float32)
    o_ref[...] = (y + b2_ref[...].astype(jnp.float32)).astype(o_ref.dtype)


def two_layer_net(x, w1, b1, w2, b2, *, tile_b=None, mxu_input_dtype=None):
    """Forward of TwoLayerNet: relu(x @ w1 + b1) @ w2 + b2.

    x:  [B, D_in]
    w1: [D_in, H]    (transposed vs torch.nn.Linear.weight)
    b1: [H] / [1, H]
    w2: [H, D_out]   (transposed vs torch.nn.Linear.weight)
    b2: [D_out] / [1, D_out]
    mxu_input_dtype: optional dtype (e.g. jnp.bfloat16) to wrapper-cast the
        matmul operands to on the MXU path; accumulation stays f32.
    """
    B, D_in = x.shape
    H = w1.shape[1]
    D_out = w2.shape[1]
    out_dtype = x.dtype
    b1 = jnp.asarray(b1).reshape(-1)
    b2 = jnp.asarray(b2).reshape(-1)

    small_out = D_out <= _SMALL_DIM

    if small_out:
        # ---------------- lane-dense [feature, batch] path -------------------
        if tile_b is None:
            tile_b = min(2048, _round_up(pl.cdiv(B, 2), _LANE))
        tile_b = max(_LANE, _round_up(tile_b, _LANE))         # batch on lanes
        steps = max(2, pl.cdiv(B, tile_b))
        if steps % 2:                                         # even -> v7x TC1 busy
            steps += 1
        B_pad = steps * tile_b

        x_p = jnp.pad(x, ((0, B_pad - B), (0, 0))) if B_pad != B else x
        # xT, W1^T, b1 column, W2, flat b2 — all layout plumbing wrapper-side.
        args = (x_p.T, w1.T, b1.reshape(H, 1), w2, b2)
        unroll_l1 = D_in <= _SMALL_DIM
        kernel = _make_feature_major_kernel(D_in, H, D_out, unroll_l1)

        in_specs = [
            pl.BlockSpec((D_in, tile_b), lambda i: (0, i)),      # x^T: streamed, lane-dense
            pl.BlockSpec((H, D_in), lambda i: (0, 0)),           # W1^T: VMEM-resident
            pl.BlockSpec((H, 1), lambda i: (0, 0)),              # b1 column: resident
            pl.BlockSpec((H, D_out), lambda i: (0, 0)),          # W2: resident
            pl.BlockSpec(memory_space=pltpu.MemorySpace.SMEM),   # b2: flat SMEM scalars
        ]
        out_specs = pl.BlockSpec((D_out, tile_b), lambda i: (0, i))
        out_shape = jax.ShapeDtypeStruct((D_out, B_pad), out_dtype)

        itemsize = jnp.dtype(out_dtype).itemsize
        vmem_est = (2 * (D_in + D_out) * tile_b * itemsize       # streamed tiles (2-buffered)
                    + 2 * (H * D_in + H + H * D_out) * itemsize  # resident (still 2-buffered)
                    + 3 * H * tile_b * 4)                        # live f32 h / products
    else:
        # ---------------- batch-major MXU path -------------------------------
        if mxu_input_dtype is not None:
            x = x.astype(mxu_input_dtype)
            w1 = w1.astype(mxu_input_dtype)
            w2 = w2.astype(mxu_input_dtype)
        pack = _sublane_pack(x.dtype)
        if tile_b is None:
            tile_b = min(512, _round_up(pl.cdiv(B, 2), _LANE))   # MXU likes M % 128 == 0
        tile_b = max(pack, _round_up(tile_b, pack))
        steps = max(2, pl.cdiv(B, tile_b))
        if steps % 2:                                            # even -> v7x TC1 busy
            steps += 1
        B_pad = steps * tile_b

        x_p = jnp.pad(x, ((0, B_pad - B), (0, 0))) if B_pad != B else x
        args = (x_p, w1, b1.reshape(1, H), w2, b2.reshape(1, D_out))
        kernel = _mxu_kernel

        in_specs = [
            pl.BlockSpec((tile_b, D_in), lambda i: (i, 0)),      # x: streamed
            pl.BlockSpec((D_in, H), lambda i: (0, 0)),           # W1: resident
            pl.BlockSpec((1, H), lambda i: (0, 0)),              # b1: resident
            pl.BlockSpec((H, D_out), lambda i: (0, 0)),          # W2: resident
            pl.BlockSpec((1, D_out), lambda i: (0, 0)),          # b2: resident
        ]
        out_specs = pl.BlockSpec((tile_b, D_out), lambda i: (i, 0))
        out_shape = jax.ShapeDtypeStruct((B_pad, D_out), out_dtype)

        itemsize = jnp.dtype(x.dtype).itemsize
        vmem_est = (2 * tile_b * (D_in * itemsize + D_out * jnp.dtype(out_dtype).itemsize)
                    + 2 * (D_in * H + H + H * D_out + D_out) * itemsize
                    + 3 * tile_b * max(H, D_out) * 4)

    flops = 2 * B_pad * D_in * H + 2 * B_pad * H * D_out
    bytes_accessed = (sum(int(a.size) * jnp.dtype(a.dtype).itemsize for a in args)
                      + B_pad * D_out * jnp.dtype(out_dtype).itemsize)

    y = pl.pallas_call(
        kernel,
        out_shape=out_shape,
        grid_spec=pltpu.PrefetchScalarGridSpec(
            num_scalar_prefetch=0,
            grid=(steps,),
            in_specs=in_specs,
            out_specs=out_specs,
        ),
        compiler_params=pltpu.CompilerParams(
            # Batch tiles are independent -> shard across TCs on v7x megacore.
            dimension_semantics=("parallel",),
            vmem_limit_bytes=_vmem_limit(vmem_est),
        ),
        cost_estimate=pl.CostEstimate(
            flops=int(flops), transcendentals=0, bytes_accessed=int(bytes_accessed)),
    )(*args)

    if small_out:
        y = y.T                                               # back to [B_pad, D_out]
    return y[:B] if B_pad != B else y


if __name__ == "__main__":
    hi = jax.lax.Precision.HIGHEST

    # ---- shapes implied by the reference script: 100 samples of width 2 -----
    B, D_in, H, D_out = 100, 2, 32, 1
    key = jax.random.PRNGKey(0)
    kx, kw1, kb1, kw2, kb2 = jax.random.split(key, 5)

    x = jax.random.uniform(kx, (B, D_in), jnp.float32, 0.0, 0.5)
    bound1 = 1.0 / (D_in ** 0.5)
    w1 = jax.random.uniform(kw1, (D_in, H), jnp.float32, -bound1, bound1)
    b1 = jax.random.uniform(kb1, (1, H), jnp.float32, -bound1, bound1)
    bound2 = 1.0 / (H ** 0.5)
    w2 = jax.random.uniform(kw2, (H, D_out), jnp.float32, -bound2, bound2)
    b2 = jax.random.uniform(kb2, (1, D_out), jnp.float32, -bound2, bound2)

    # Default tiling: lane-dense feature-major path, 2 grid steps of 128 lanes.
    y = jax.block_until_ready(two_layer_net(x, w1, b1, w2, b2))
    ref = jnp.dot(jnp.maximum(jnp.dot(x, w1, precision=hi) + b1, 0.0),
                  w2, precision=hi) + b2
    assert y.shape == (B, D_out)
    assert jnp.allclose(y, ref, atol=1e-5, rtol=1e-5)

    # ---- larger shapes exercise the batch-major MXU path (native f32 feed) ---
    B2, D_in2, H2, D_out2 = 256, 256, 256, 128
    k2 = jax.random.split(jax.random.PRNGKey(1), 5)
    x2 = jax.random.uniform(k2[0], (B2, D_in2), jnp.float32, 0.0, 0.5)
    w1b = jax.random.uniform(k2[1], (D_in2, H2), jnp.float32, -0.0625, 0.0625)
    b1b = jax.random.uniform(k2[2], (1, H2), jnp.float32, -0.0625, 0.0625)
    w2b = jax.random.uniform(k2[3], (H2, D_out2), jnp.float32, -0.0625, 0.0625)
    b2b = jax.random.uniform(k2[4], (1, D_out2), jnp.float32, -0.0625, 0.0625)

    y2 = jax.block_until_ready(two_layer_net(x2, w1b, b1b, w2b, b2b))
    ref2 = jnp.dot(jnp.maximum(jnp.dot(x2, w1b, precision=hi) + b1b, 0.0),
                   w2b, precision=hi) + b2b
    assert y2.shape == (B2, D_out2)
    assert jnp.allclose(y2, ref2, atol=2e-2, rtol=2e-2)

    # ---- same MXU path with wrapper-side bf16 operand cast (v6e/v7x feed) ----
    y3 = jax.block_until_ready(
        two_layer_net(x2, w1b, b1b, w2b, b2b, mxu_input_dtype=jnp.bfloat16))
    h_bf = jnp.maximum(
        jnp.dot(x2.astype(jnp.bfloat16), w1b.astype(jnp.bfloat16),
                preferred_element_type=jnp.float32) + b1b, 0.0)
    ref3 = jnp.dot(h_bf.astype(jnp.bfloat16), w2b.astype(jnp.bfloat16),
                   preferred_element_type=jnp.float32) + b2b
    assert y3.shape == (B2, D_out2)
    assert jnp.allclose(y3, ref3.astype(y3.dtype), atol=2e-2, rtol=2e-2)

    print("KERNEL_OK")
</pallas_src>

<mosaic_0001>
module attributes {stable_mosaic.version = 11 : i64} {
  func.func @kernel(%arg0: i32, %arg1: memref<2x128xf32, #tpu.memory_space<vmem>>, %arg2: memref<32x2xf32, #tpu.memory_space<vmem>>, %arg3: memref<32x1xf32, #tpu.memory_space<vmem>>, %arg4: memref<32x1xf32, #tpu.memory_space<vmem>>, %arg5: memref<1xf32, #tpu.memory_space<smem>>, %arg6: memref<1x128xf32, #tpu.memory_space<vmem>>) attributes {dimension_semantics = [#tpu.dimension_semantics<parallel>], iteration_bounds = array<i64: 2>, scalar_prefetch = 0 : i64, scratch_operands = 0 : i64, tpu.core_type = #tpu.core_type<tc>, window_params = [{transform_indices = @transform_0, window_bounds = array<i64: 2, 128>}, {pipeline_mode = #tpu.pipeline_mode<synchronous>, transform_indices = @transform_1, window_bounds = array<i64: 32, 2>}, {pipeline_mode = #tpu.pipeline_mode<synchronous>, transform_indices = @transform_2, window_bounds = array<i64: 32, 1>}, {pipeline_mode = #tpu.pipeline_mode<synchronous>, transform_indices = @transform_3, window_bounds = array<i64: 32, 1>}, {transform_indices = @transform_4, window_bounds = array<i64: 1>}, {transform_indices = @transform_5, window_bounds = array<i64: 1, 128>}]} {
    %c0 = arith.constant 0 : index
    %c0_0 = arith.constant 0 : index
    %0 = vector.load %arg3[%c0, %c0_0] : memref<32x1xf32, #tpu.memory_space<vmem>>, vector<32x1xf32>
    %c0_1 = arith.constant 0 : index
    %c0_2 = arith.constant 0 : index
    %1 = vector.load %arg1[%c0_1, %c0_2] : memref<2x128xf32, #tpu.memory_space<vmem>>, vector<2x128xf32>
    %c0_3 = arith.constant 0 : index
    %c0_4 = arith.constant 0 : index
    %2 = vector.load %arg2[%c0_3, %c0_4] : memref<32x2xf32, #tpu.memory_space<vmem>>, vector<32x2xf32>
    %3 = vector.shape_cast %0 : vector<32x1xf32> to vector<32x1xf32>
    %4 = vector.broadcast %3 : vector<32x1xf32> to vector<32x128xf32>
    %5 = vector.extract_strided_slice %2 {offsets = [0, 0], sizes = [32, 1], strides = [1, 1]} : vector<32x2xf32> to vector<32x1xf32>
    %6 = vector.extract_strided_slice %1 {offsets = [0, 0], sizes = [1, 128], strides = [1, 1]} : vector<2x128xf32> to vector<1x128xf32>
    %7 = vector.broadcast %5 : vector<32x1xf32> to vector<32x128xf32>
    %8 = vector.broadcast %6 : vector<1x128xf32> to vector<32x128xf32>
    %9 = arith.mulf %7, %8 : vector<32x128xf32>
    %10 = arith.addf %4, %9 : vector<32x128xf32>
    %11 = vector.extract_strided_slice %2 {offsets = [0, 1], sizes = [32, 1], strides = [1, 1]} : vector<32x2xf32> to vector<32x1xf32>
    %12 = vector.extract_strided_slice %1 {offsets = [1, 0], sizes = [1, 128], strides = [1, 1]} : vector<2x128xf32> to vector<1x128xf32>
    %13 = vector.broadcast %11 : vector<32x1xf32> to vector<32x128xf32>
    %14 = vector.broadcast %12 : vector<1x128xf32> to vector<32x128xf32>
    %15 = arith.mulf %13, %14 : vector<32x128xf32>
    %16 = arith.addf %10, %15 : vector<32x128xf32>
    %cst = arith.constant 0.000000e+00 : f32
    %17 = vector.broadcast %cst : f32 to vector<32x128xf32>
    %18 = arith.maximumf %16, %17 : vector<32x128xf32>
    %c0_5 = arith.constant 0 : index
    %c0_6 = arith.constant 0 : index
    %19 = vector.load %arg4[%c0_5, %c0_6] : memref<32x1xf32, #tpu.memory_space<vmem>>, vector<32x1xf32>
    %20 = vector.broadcast %19 : vector<32x1xf32> to vector<32x128xf32>
    %21 = arith.mulf %18, %20 : vector<32x128xf32>
    %cst_7 = arith.constant dense<0.000000e+00> : vector<128xf32>
    %22 = vector.multi_reduction <add>, %21, %cst_7 [0] : vector<32x128xf32> to vector<128xf32>
    %23 = vector.shape_cast %22 : vector<128xf32> to vector<1x128xf32>
    %c0_8 = arith.constant 0 : index
    %24 = memref.load %arg5[%c0_8] : memref<1xf32, #tpu.memory_space<smem>>
    %25 = vector.broadcast %24 : f32 to vector<1x128xf32>
    %26 = arith.addf %23, %25 : vector<1x128xf32>
    %c0_9 = arith.constant 0 : index
    %c0_10 = arith.constant 0 : index
    %27 = vector.load %arg6[%c0_9, %c0_10] : memref<1x128xf32, #tpu.memory_space<vmem>>, vector<1x128xf32>
    tpu.vector_store %arg6[%c0_9, %c0_10], %26 {strides = array<i32>} : memref<1x128xf32, #tpu.memory_space<vmem>>, vector<1x128xf32>,
    return
  }
  func.func @transform_0(%arg0: i32) -> (i32, i32) {
    %c0_i32 = arith.constant 0 : i32
    %c0_i32_0 = arith.constant 0 : i32
    return %c0_i32, %arg0 : i32, i32
  }
  func.func @transform_1(%arg0: i32) -> (i32, i32) {
    %c0_i32 = arith.constant 0 : i32
    %c0_i32_0 = arith.constant 0 : i32
    %c0_i32_1 = arith.constant 0 : i32
    return %c0_i32, %c0_i32_0 : i32, i32
  }
  func.func @transform_2(%arg0: i32) -> (i32, i32) {
    %c0_i32 = arith.constant 0 : i32
    %c0_i32_0 = arith.constant 0 : i32
    %c0_i32_1 = arith.constant 0 : i32
    return %c0_i32, %c0_i32_0 : i32, i32
  }
  func.func @transform_3(%arg0: i32) -> (i32, i32) {
    %c0_i32 = arith.constant 0 : i32
    %c0_i32_0 = arith.constant 0 : i32
    %c0_i32_1 = arith.constant 0 : i32
    return %c0_i32, %c0_i32_0 : i32, i32
  }
  func.func @transform_4(%arg0: i32) -> i32 {
    %c0_i32 = arith.constant 0 : i32
    %c0_i32_0 = arith.constant 0 : i32
    return %c0_i32 : i32
  }
  func.func @transform_5(%arg0: i32) -> (i32, i32) {
    %c0_i32 = arith.constant 0 : i32
    %c0_i32_0 = arith.constant 0 : i32
    return %c0_i32, %arg0 : i32, i32
  }
}

</mosaic_0001>

<llo_original>
// kernel: tpu_custom_call.1
$region0: #{tpu_custom_call.1}
  #allocation0 [shape = 'u32[]', space=smem, size = 0x4, offset = 0x4, fixed_abs, tag = 'smem constant byte address 0x4 - core index']
  #allocation1 [shape = 'u32[72,128]{1,0:T(1,128)}', space=vmem, size = 0x9000, scoped, tag = 'internal scratch']
  #allocation2 [shape = 'f32[1]{0:T(128)S(6)}', space=smem, size = 0x200, scoped, tag = 'scoped memory for tpu_custom_call.1']
  %s0 = inlined_call_operand.vmem [shape: f32[2,256], index: 0, kind: input, shape index: {}]
  %s1 = inlined_call_operand.vmem [shape: f32[32,2], index: 1, kind: input, shape index: {}]
  %s2 = inlined_call_operand.vmem [shape: f32[32,1], index: 2, kind: input, shape index: {}]
  %s3 = inlined_call_operand.vmem [shape: f32[32,1], index: 3, kind: input, shape index: {}]
  %s4 = inlined_call_operand.<no memory space> [shape: f32[1], index: 4, kind: input, shape index: {}]
  %s5 = inlined_call_operand.hbm [shape: f32[1,256], index: 5, kind: output, shape index: {}]
  %s6 = sld [smem:[#allocation0]]
  $region53: #{tpu_custom_call.1} parent=0
    _
  %s8 = ssub.s32 1, %s6
  %s9 = scalar_select 0, %s8, %s6
  %10 = sst [smem:[#allocation2]] %s4
  $region1: #{tpu_custom_call.1} parent=0
    #allocation3 [shape = 'u8[1024]{0}', space=vmem, size = 0x400, scoped, tag = 'output window, operand 0']
    #allocation4 [shape = 's32[2]{0}', space=sflag, size = 0x8, scoped, tag = 'scoped memory for tpu_custom_call.1']
    %11 = vsyncpa [#allocation4], 0
    %s12 = scalar_lea.sflag [#allocation4], 1
    %13 = vsyncpa %s12, 0
    loop: start=0, step=1, limit=4
    $region2: #{tpu_custom_call.1} parent=1 // loop_pre_header
      _
    $region3: #{tpu_custom_call.1} parent=1 // loop_header
      %s15 = sphi 0, %s19
      %p16 = scmp.ge.s32.totalorder %s15, 4
      %s25 = sphi 0, %s27
      %s28 = sphi 0, %s25
      %s29 = sphi 0, %s28
      %s45 = sphi 0, %s29
      %s49 = sphi 0, %s49
      %s51 = sphi 0, %s49
      %s52 = sphi 0, %s51
      %s66 = sphi 0, %s52
      %s70 = sphi 0, %s70
      %s72 = sphi 0, %s70
      %s73 = sphi 0, %s72
      %s87 = sphi 0, %s73
      %s91 = sphi 0, %s91
      %s93 = sphi 0, %s91
      %s94 = sphi 0, %s93
      %s108 = sphi 0, %s94
      %s112 = sphi 0, %s112
      %s114 = sphi 0, %s112
      %s115 = sphi 0, %s114
      %s129 = sphi 0, %s115
      %s135 = sphi 0, %s137
      %s138 = sphi 0, %s135
      %s139 = sphi 0, %s138
      %s155 = sphi 0, %s139
    $region4: #{tpu_custom_call.1} parent=1 // loop_header_branch
      %18 = sbr.rel (%p16) target = $region8
    $region5: #{tpu_custom_call.1} parent=1 // loop_body
      %s20 = ssub.s32 %s15, 1
      %s21 = ssub.s32 %s15, 2
      %s22 = sadd.s32 %s15, 1
      %s23 = ssub.s32 %s15, %s22
      %p24 = scmp.eq.s32.totalorder %s23, 0
      %s26 = sadd.s32 %s25, 1
      %s27 = scalar_select %p24, %s25, %s26
      %p30 = pneg %p24
      %p31 = scmp.eq.s32.totalorder %s15, 1
      %p32 = por %p30, %p31
      %p33 = scmp.ne.s32.totalorder %s25, %s28
      %p34 = scmp.eq.s32.totalorder %s15, 0
      %p35 = por %p33, %p34
      %p36 = scmp.ne.s32.totalorder %s25, %s28
      %p37 = scmp.eq.s32.totalorder %s20, 1
      %p38 = por %p36, %p37
      %p39 = scmp.ne.s32.totalorder %s28, %s29
      %p40 = scmp.eq.s32.totalorder %s20, 0
      %p41 = por %p39, %p40
      %p42 = scmp.ne.s32.totalorder %s28, %s29
      %p43 = scmp.eq.s32.totalorder %s21, 1
      %p44 = por %p42, %p43
      %p46 = scmp.ne.s32.totalorder %s29, %s45
      %p47 = scmp.eq.s32.totalorder %s21, 0
      %p48 = por %p46, %p47
      %s50 = sadd.s32 %s49, 1
      %p53 = scmp.eq.s32.totalorder %s15, 1
      %p54 = scmp.ne.s32.totalorder %s49, %s51
      %p55 = scmp.eq.s32.totalorder %s15, 0
      %p56 = por %p54, %p55
      %p57 = scmp.ne.s32.totalorder %s49, %s51
      %p58 = scmp.eq.s32.totalorder %s20, 1
      %p59 = por %p57, %p58
      %p60 = scmp.ne.s32.totalorder %s51, %s52
      %p61 = scmp.eq.s32.totalorder %s20, 0
      %p62 = por %p60, %p61
      %p63 = scmp.ne.s32.totalorder %s51, %s52
      %p64 = scmp.eq.s32.totalorder %s21, 1
      %p65 = por %p63, %p64
      %p67 = scmp.ne.s32.totalorder %s52, %s66
      %p68 = scmp.eq.s32.totalorder %s21, 0
      %p69 = por %p67, %p68
      %s71 = sadd.s32 %s70, 1
      %p74 = scmp.eq.s32.totalorder %s15, 1
      %p75 = scmp.ne.s32.totalorder %s70, %s72
      %p76 = scmp.eq.s32.totalorder %s15, 0
      %p77 = por %p75, %p76
      %p78 = scmp.ne.s32.totalorder %s70, %s72
      %p79 = scmp.eq.s32.totalorder %s20, 1
      %p80 = por %p78, %p79
      %p81 = scmp.ne.s32.totalorder %s72, %s73
      %p82 = scmp.eq.s32.totalorder %s20, 0
      %p83 = por %p81, %p82
      %p84 = scmp.ne.s32.totalorder %s72, %s73
      %p85 = scmp.eq.s32.totalorder %s21, 1
      %p86 = por %p84, %p85
      %p88 = scmp.ne.s32.totalorder %s73, %s87
      %p89 = scmp.eq.s32.totalorder %s21, 0
      %p90 = por %p88, %p89
      %s92 = sadd.s32 %s91, 1
      %p95 = scmp.eq.s32.totalorder %s15, 1
      %p96 = scmp.ne.s32.totalorder %s91, %s93
      %p97 = scmp.eq.s32.totalorder %s15, 0
      %p98 = por %p96, %p97
      %p99 = scmp.ne.s32.totalorder %s91, %s93
      %p100 = scmp.eq.s32.totalorder %s20, 1
      %p101 = por %p99, %p100
      %p102 = scmp.ne.s32.totalorder %s93, %s94
      %p103 = scmp.eq.s32.totalorder %s20, 0
      %p104 = por %p102, %p103
      %p105 = scmp.ne.s32.totalorder %s93, %s94
      %p106 = scmp.eq.s32.totalorder %s21, 1
      %p107 = por %p105, %p106
      %p109 = scmp.ne.s32.totalorder %s94, %s108
      %p110 = scmp.eq.s32.totalorder %s21, 0
      %p111 = por %p109, %p110
      %s113 = sadd.s32 %s112, 1
      %p116 = scmp.eq.s32.totalorder %s15, 1
      %p117 = scmp.ne.s32.totalorder %s112, %s114
      %p118 = scmp.eq.s32.totalorder %s15, 0
      %p119 = por %p117, %p118
      %p120 = scmp.ne.s32.totalorder %s112, %s114
      %p121 = scmp.eq.s32.totalorder %s20, 1
      %p122 = por %p120, %p121
      %p123 = scmp.ne.s32.totalorder %s114, %s115
      %p124 = scmp.eq.s32.totalorder %s20, 0
      %p125 = por %p123, %p124
      %p126 = scmp.ne.s32.totalorder %s114, %s115
      %p127 = scmp.eq.s32.totalorder %s21, 1
      %p128 = por %p126, %p127
      %p130 = scmp.ne.s32.totalorder %s115, %s129
      %p131 = scmp.eq.s32.totalorder %s21, 0
      %p132 = por %p130, %p131
      %s133 = ssub.s32 %s15, %s22
      %p134 = scmp.eq.s32.totalorder %s133, 0
      %s136 = sadd.s32 %s135, 1
      %s137 = scalar_select %p134, %s135, %s136
      %p140 = pneg %p134
      %p141 = scmp.eq.s32.totalorder %s15, 1
      %p142 = por %p140, %p141
      %p143 = scmp.ne.s32.totalorder %s135, %s138
      %p144 = scmp.eq.s32.totalorder %s15, 0
      %p145 = por %p143, %p144
      %p146 = scmp.ne.s32.totalorder %s135, %s138
      %p147 = scmp.eq.s32.totalorder %s20, 1
      %p148 = por %p146, %p147
      %p149 = scmp.ne.s32.totalorder %s138, %s139
      %p150 = scmp.eq.s32.totalorder %s20, 0
      %p151 = por %p149, %p150
      %p152 = scmp.ne.s32.totalorder %s138, %s139
      %p153 = scmp.eq.s32.totalorder %s21, 1
      %p154 = por %p152, %p153
      %p156 = scmp.ne.s32.totalorder %s139, %s155
      %p157 = scmp.eq.s32.totalorder %s21, 0
      %p158 = por %p156, %p157
      %p159 = scmp.le.s32.totalorder 1, %s15
      %p160 = scmp.lt.s32.totalorder %s15, 3
      %p161 = pnand %p159, %p160
      %p162 = pneg %p161
      // Predicated region
      $region9: #{tpu_custom_call.1} parent=5 // pred_check
        _
      $region10: #{tpu_custom_call.1} parent=5 // pred_check_branch
        %164 = sbr.rel (%p161) target = $region12
      $region11: #{tpu_custom_call.1} parent=5 // pred_region
        %s165 = ssub.s32 %s15, 1
        // Predicated region
        $region13: #{tpu_custom_call.1} parent=11 // pred_check
          %p166 = pneg %p62
        $region14: #{tpu_custom_call.1} parent=11 // pred_check_branch
          %168 = sbr.rel (%p166) target = $region16
        $region15: #{tpu_custom_call.1} parent=11 // pred_region
          _
        $region16: #{tpu_custom_call.1} parent=11 // pred_fallthru
          _
        // Predicated region
        $region17: #{tpu_custom_call.1} parent=11 // pred_check
          %p169 = pneg %p83
        $region18: #{tpu_custom_call.1} parent=11 // pred_check_branch
          %171 = sbr.rel (%p169) target = $region20
        $region19: #{tpu_custom_call.1} parent=11 // pred_region
          _
        $region20: #{tpu_custom_call.1} parent=11 // pred_fallthru
          _
        // Predicated region
        $region21: #{tpu_custom_call.1} parent=11 // pred_check
          %p172 = pneg %p104
        $region22: #{tpu_custom_call.1} parent=11 // pred_check_branch
          %174 = sbr.rel (%p172) target = $region24
        $region23: #{tpu_custom_call.1} parent=11 // pred_region
          _
        $region24: #{tpu_custom_call.1} parent=11 // pred_fallthru
          _
        // Predicated region
        $region25: #{tpu_custom_call.1} parent=11 // pred_check
          %p175 = pneg %p125
        $region26: #{tpu_custom_call.1} parent=11 // pred_check_branch
          %177 = sbr.rel (%p175) target = $region28
        $region27: #{tpu_custom_call.1} parent=11 // pred_region
          _
        $region28: #{tpu_custom_call.1} parent=11 // pred_fallthru
          _
      $region12: #{tpu_custom_call.1} parent=5 // pred_fallthru
        _
      %p178 = scmp.lt.s32.totalorder %s15, 2
      // Predicated region
      $region29: #{tpu_custom_call.1} parent=5 // pred_check
        %p179 = pneg %p178
      $region30: #{tpu_custom_call.1} parent=5 // pred_check_branch
        %181 = sbr.rel (%p179) target = $region32
      $region31: #{tpu_custom_call.1} parent=5 // pred_region
        // Predicated region
        $region33: #{tpu_custom_call.1} parent=31 // pred_check
          %p182 = pneg %p35
        $region34: #{tpu_custom_call.1} parent=31 // pred_check_branch
          %184 = sbr.rel (%p182) target = $region36
        $region35: #{tpu_custom_call.1} parent=31 // pred_region
          %p185 = scmp.lt.s32.totalorder %s15, 1
          %s186 = scalar_select %p185, %s15, 1
          %s187 = smul.addr %s186, 2
          %s188 = scalar_lea.vmem %s0, %s187
        $region36: #{tpu_custom_call.1} parent=31 // pred_fallthru
          _
      $region32: #{tpu_custom_call.1} parent=5 // pred_fallthru
        _
      %p189 = scmp.le.s32.totalorder 1, %s15
      %p190 = scmp.lt.s32.totalorder %s15, 3
      %p191 = pnand %p189, %p190
      %p192 = pneg %p191
      // Predicated region
      $region37: #{tpu_custom_call.1} parent=5 // pred_check
        _
      $region38: #{tpu_custom_call.1} parent=5 // pred_check_branch
        %194 = sbr.rel (%p191) target = $region40
      $region39: #{tpu_custom_call.1} parent=5 // pred_region
        %s195 = ssub.s32 %s15, 1
        %p196 = scmp.lt.s32.totalorder %s20, 1
        %s197 = scalar_select %p196, %s20, 1
        %s198 = smul.addr %s197, 2
        %s199 = scalar_lea.vmem %s0, %s198
        %p200 = pneg %p41
        %p201 = pneg %p38
        %p202 = pneg %p62
        %p203 = pneg %p59
        %p204 = pneg %p83
        %p205 = pneg %p80
        %p206 = pneg %p104
        %p207 = pneg %p101
        %p208 = pneg %p125
        %p209 = pneg %p122
        %p210 = pneg %p151
        %p211 = pneg %p148
        %s212 = sand.u32 %s138, 1
        %s213 = scalar_lea.sflag [#allocation4], %s212
        %s214 = sand.u32 %s138, 1
        %s215 = scalar_lea.vmem [#allocation3], %s214
        %p216 = scmp.lt.s32.totalorder %s20, 1
        %s217 = scalar_select %p216, %s20, 1
        %s218 = smul.addr %s217, 2
        %s219 = scalar_lea.vmem %s0, %s218
        %v220 = vld [vmem:[%s2] sm:$0xff]
        %v221 = vld [vmem:[%s2 + $0x8] sm:$0xff]
        %v222 = vld [vmem:[%s2 + $0x10] sm:$0xff]
        %v223 = vld [vmem:[%s2 + $0x18] sm:$0xff]
        %v224 = vld [vmem:[%s219] sm:$0x3]
        %v225 = vld [vmem:[%s1] sm:$0xff]
        %v226 = vld [vmem:[%s1 + $0x8] sm:$0xff]
        %v227 = vld [vmem:[%s1 + $0x10] sm:$0xff]
        %v228 = vld [vmem:[%s1 + $0x18] sm:$0xff]
        %230 = vset.pattern.permute.xlu0 0
        %231 = vperm.xlu0 %230, %v220
        %v232 = vpop.permute.xlu0 %231
        %235 = vset.pattern.permute.xlu0 0
        %236 = vperm.xlu0 %235, %v221
        %v237 = vpop.permute.xlu0 %236
        %240 = vset.pattern.permute.xlu0 0
        %241 = vperm.xlu0 %240, %v222
        %v242 = vpop.permute.xlu0 %241
        %245 = vset.pattern.permute.xlu0 0
        %246 = vperm.xlu0 %245, %v223
        %v247 = vpop.permute.xlu0 %246
        %250 = vset.pattern.permute.xlu0 0
        %251 = vperm.xlu0 %250, %v225
        %v252 = vpop.permute.xlu0 %251
        %255 = vset.pattern.permute.xlu0 0
        %256 = vperm.xlu0 %255, %v226
        %v257 = vpop.permute.xlu0 %256
        %260 = vset.pattern.permute.xlu0 0
        %261 = vperm.xlu0 %260, %v227
        %v262 = vpop.permute.xlu0 %261
        %265 = vset.pattern.permute.xlu0 0
        %266 = vperm.xlu0 %265, %v228
        %v267 = vpop.permute.xlu0 %266
        %v269 = vperm.slane %v224, 0
        %v270 = vmul.f32 %v252, %v269
        %v271 = vmul.f32 %v257, %v269
        %v272 = vmul.f32 %v262, %v269
        %v273 = vmul.f32 %v267, %v269
        %v274 = vadd.f32 %v232, %v270
        %v275 = vadd.f32 %v237, %v271
        %v276 = vadd.f32 %v242, %v272
        %v277 = vadd.f32 %v247, %v273
        %278 = vset.pattern.permute.xlu0 1
        %279 = vperm.xlu0 %278, %v225
        %v280 = vpop.permute.xlu0 %279
        %282 = vset.pattern.permute.xlu0 1
        %283 = vperm.xlu0 %282, %v226
        %v284 = vpop.permute.xlu0 %283
        %286 = vset.pattern.permute.xlu0 1
        %287 = vperm.xlu0 %286, %v227
        %v288 = vpop.permute.xlu0 %287
        %290 = vset.pattern.permute.xlu0 1
        %291 = vperm.xlu0 %290, %v228
        %v292 = vpop.permute.xlu0 %291
        %v294 = vperm.slane %v224, 1
        %v295 = vmul.f32 %v280, %v294
        %v296 = vmul.f32 %v284, %v294
        %v297 = vmul.f32 %v288, %v294
        %v298 = vmul.f32 %v292, %v294
        %v299 = vadd.f32 %v274, %v295
        %v300 = vadd.f32 %v275, %v296
        %v301 = vadd.f32 %v276, %v297
        %v302 = vadd.f32 %v277, %v298
        %v303 = vmax.f32 %v299, 0.0
        %v304 = vmax.f32 %v300, 0.0
        %v305 = vmax.f32 %v301, 0.0
        %v306 = vmax.f32 %v302, 0.0
        %v307 = vld [vmem:[%s3] sm:$0xff]
        %v308 = vld [vmem:[%s3 + $0x8] sm:$0xff]
        %v309 = vld [vmem:[%s3 + $0x10] sm:$0xff]
        %v310 = vld [vmem:[%s3 + $0x18] sm:$0xff]
        %312 = vset.pattern.permute.xlu0 0
        %313 = vperm.xlu0 %312, %v307
        %v314 = vpop.permute.xlu0 %313
        %317 = vset.pattern.permute.xlu0 0
        %318 = vperm.xlu0 %317, %v308
        %v319 = vpop.permute.xlu0 %318
        %322 = vset.pattern.permute.xlu0 0
        %323 = vperm.xlu0 %322, %v309
        %v324 = vpop.permute.xlu0 %323
        %327 = vset.pattern.permute.xlu0 0
        %328 = vperm.xlu0 %327, %v310
        %v329 = vpop.permute.xlu0 %328
        %v331 = vmul.f32 %v303, %v314
        %v332 = vmul.f32 %v304, %v319
        %v333 = vmul.f32 %v305, %v324
        %v334 = vmul.f32 %v306, %v329
        %v335 = vadd.f32 %v331, %v332
        %v336 = vadd.f32 %v335, %v333
        %v337 = vadd.f32 %v336, %v334
        %v338 = vrot.slane %v337, 4
        %v339 = vadd.f32 %v337, %v338
        %v340 = vrot.slane %v339, 2
        %v341 = vadd.f32 %v339, %v340
        %v342 = vrot.slane %v341, 1
        %v343 = vadd.f32 %v341, %v342
        %s344 = sld [smem:[#allocation2]]
        %v345 = vstv %s344
        %v346 = vadd.f32 %v343, %v345
        %347 = vst [vmem:[%s215] sm:$0x1] %v346
        %s348 = sand.u32 %s138, 1
        %s349 = scalar_lea.sflag [#allocation4], %s348
        %s350 = sand.u32 %s138, 1
        %s351 = scalar_lea.vmem [#allocation3], %s350
        // Predicated region
        $region41: #{tpu_custom_call.1} parent=39 // pred_check
          %p352 = pneg %p148
        $region42: #{tpu_custom_call.1} parent=39 // pred_check_branch
          %354 = sbr.rel (%p352) target = $region44
        $region43: #{tpu_custom_call.1} parent=39 // pred_region
          %356 = vsyncadd %s349, 0
          %s357 = scalar_lea.hbm %s5, %s20
          %s359 = sshll.u32 %s351, 4
          %s360 = int_to_ptr.vmem [resolvable:$true] %s359
          %s361 = sshll.u32 %s357, 4
          %s362 = int_to_ptr.hbm [resolvable:$true] %s361
          %364 = dma.vmem_to_hbm [thread:$0]  %s360, 16, %s362, %s349
        $region44: #{tpu_custom_call.1} parent=39 // pred_fallthru
          _
      $region40: #{tpu_custom_call.1} parent=5 // pred_fallthru
        _
      %p365 = scmp.le.s32.totalorder 2, %s15
      // Predicated region
      $region45: #{tpu_custom_call.1} parent=5 // pred_check
        %p366 = pneg %p365
      $region46: #{tpu_custom_call.1} parent=5 // pred_check_branch
        %368 = sbr.rel (%p366) target = $region48
      $region47: #{tpu_custom_call.1} parent=5 // pred_region
        %s369 = ssub.s32 %s15, 2
        // Predicated region
        $region49: #{tpu_custom_call.1} parent=47 // pred_check
          %p370 = pneg %p154
        $region50: #{tpu_custom_call.1} parent=47 // pred_check_branch
          %372 = sbr.rel (%p370) target = $region52
        $region51: #{tpu_custom_call.1} parent=47 // pred_region
          %s373 = sand.u32 %s139, 1
          %s374 = scalar_lea.sflag [#allocation4], %s373
          %s375 = sand.u32 %s139, 1
          %s376 = scalar_lea.vmem [#allocation3], %s375
          %378 = dma.done %s374, 16
        $region52: #{tpu_custom_call.1} parent=47 // pred_fallthru
          _
      $region48: #{tpu_custom_call.1} parent=5 // pred_fallthru
        _
    $region6: #{tpu_custom_call.1} parent=1 // loop_footer
      %s19 = sadd.s32 1, %s15
    $region7: #{tpu_custom_call.1} parent=1 // loop_footer_branch
      %14 = sbr.rel target = $region3
    $region8: #{tpu_custom_call.1} parent=1 // loop_exit
      _
    %379 = vsyncpa [#allocation4], 1
    %s380 = scalar_lea.sflag [#allocation4], 1
    %381 = vsyncpa %s380, 1

</llo_original>
